<compile_context>
chip_gen: v7x
topology: tpu7x:2x2x1
jax: 0.10.0
libtpu: 0.0.40
codegen_flags: <defaults>
</compile_context>

<pallas_src>
import functools

import jax
import jax.numpy as jnp
from jax.experimental import pallas as pl
from jax.experimental.pallas import tpu as pltpu


_LANE = 128
_MAX_TILE_LANES = 8192                    # target lanes per pipelined grid step
_VMEM_BUDGET_BYTES = 12 * 1024 * 1024     # activation working-set budget (fits v5e/v6e/v7x)
_VMEM_LIMIT_BYTES = 32 * 1024 * 1024      # explicit scoped-VMEM limit (raises v5e's 16MiB default)


def _conv1x1_relu_kernel(x_ref, w_ref, b_ref, o_ref):
    """One grid step: out[b, :, tile] = relu(W @ x[b, :, tile] + bias).

    x_ref: (1, Cin, tn)   spatial chunk of H*W on the lane axis
    w_ref: (Cpre, Cin)    resident in VMEM for the whole grid
    b_ref: (Cpre, 1)
    o_ref: (1, Cpre, tn)  lane-dense output block
    """
    x = x_ref[0].astype(jnp.float32)          # (Cin, tn)
    w = w_ref[...].astype(jnp.float32)        # (Cpre, Cin)
    b = b_ref[...].astype(jnp.float32)        # (Cpre, 1)
    cin = x.shape[0]

    if cin <= 8:
        # Contraction is tiny -> VPU broadcast-FMA path (MXU would be K-padded
        # to 128 and <1% utilized; kernel is HBM-bound either way).
        acc = jnp.zeros((w.shape[0], x.shape[1]), jnp.float32)
        for k in range(cin):                  # static, unrolled
            acc = acc + w[:, k:k + 1] * x[k:k + 1, :]
    else:
        acc = jnp.dot(w, x, preferred_element_type=jnp.float32)

    y = jnp.maximum(acc + b, 0.0)
    o_ref[0] = y.astype(o_ref.dtype)


def _pick_spatial_tile(hw, cin, cpre, itemsize):
    """Choose tn (lanes per step) and the possibly-padded spatial extent."""
    # double-buffered in/out blocks + f32 compute temporaries, per lane
    per_lane_bytes = 2 * (cin + cpre) * itemsize + (cin + 2 * cpre) * 4
    cap = max(_LANE, min(_MAX_TILE_LANES, _VMEM_BUDGET_BYTES // per_lane_bytes))
    if hw <= cap:
        return hw, hw                         # one lane-dense tile per batch image
    cap = (cap // _LANE) * _LANE
    if hw % _LANE == 0:
        t = cap
        while hw % t:                         # largest multiple-of-128 divisor <= cap
            t -= _LANE
        return t, hw
    # Ragged spatial size: pad up to a multiple of the tile, slice afterwards.
    t = cap
    hw_pad = -(-hw // t) * t
    return t, hw_pad


def conv1x1_relu_pallas(x_flat, weight, bias):
    """x_flat: (B, Cin, HW); weight: (Cpre, Cin); bias: (Cpre,) -> (B, Cpre, HW)."""
    B, Cin, HW = x_flat.shape
    Cpre = weight.shape[0]
    tn, hw_pad = _pick_spatial_tile(HW, Cin, Cpre, x_flat.dtype.itemsize)
    if hw_pad != HW:
        x_flat = jnp.pad(x_flat, ((0, 0), (0, 0), (0, hw_pad - HW)))
    b2 = bias.reshape(Cpre, 1)

    y = pl.pallas_call(
        _conv1x1_relu_kernel,
        out_shape=jax.ShapeDtypeStruct((B, Cpre, hw_pad), x_flat.dtype),
        grid_spec=pltpu.PrefetchScalarGridSpec(
            num_scalar_prefetch=0,
            grid=(B, hw_pad // tn),
            in_specs=[
                pl.BlockSpec((1, Cin, tn), lambda bi, ti: (bi, 0, ti)),
                pl.BlockSpec((Cpre, Cin), lambda bi, ti: (0, 0)),
                pl.BlockSpec((Cpre, 1), lambda bi, ti: (0, 0)),
            ],
            out_specs=pl.BlockSpec((1, Cpre, tn), lambda bi, ti: (bi, 0, ti)),
        ),
        compiler_params=pltpu.CompilerParams(
            dimension_semantics=("parallel", "parallel"),
            vmem_limit_bytes=_VMEM_LIMIT_BYTES,
        ),
    )(x_flat, weight, b2)

    if hw_pad != HW:
        y = y[:, :, :HW]
    return y


def pix_shuffle_upsampler(x, weight, bias, *, output_dim, upsample_factor=2):
    """PixShuffleUpsampler.forward.

    x:      (B, Cin, H, W)  NCHW, matching PyTorch
    weight: (Cpre, Cin)     1x1 conv weight with spatial dims squeezed,
                            Cpre = output_dim * upsample_factor**2
    bias:   (Cpre,)
    returns (B, output_dim, H*r, W*r)
    """
    B, Cin, H, W = x.shape
    r = upsample_factor
    Cpre = output_dim * r * r
    assert weight.shape == (Cpre, Cin)

    # (B, Cin, H, W) -> (B, Cin, H*W) is a free (contiguous) reshape: the kernel
    # consumes NCHW directly, no pre-transpose pass.
    x_flat = x.reshape(B, Cin, H * W)

    # Hot path: 1x1 conv (channel GEMM over lane-dense spatial tiles) + bias + ReLU.
    y = conv1x1_relu_pallas(x_flat, weight, bias)          # (B, Cpre, H*W)

    # PixelShuffle: pre[b, c*r*r + i*r + j, h, w] -> out[b, c, h*r+i, w*r+j]
    # Single fused XLA transpose over the conv output.
    y = y.reshape(B, output_dim, r, r, H, W)               # (B, C, i, j, H, W)
    out = jnp.transpose(y, (0, 1, 4, 2, 5, 3))             # (B, C, H, i, W, j)
    return out.reshape(B, output_dim, H * r, W * r)


if __name__ == "__main__":
    # Module config (small): input_dim=4, output_dim=4, upsample_factor=2
    B, Cin, H, W = 2, 4, 16, 16
    output_dim, r = 4, 2
    Cpre = output_dim * r * r

    key = jax.random.PRNGKey(0)
    kx, kw, kb = jax.random.split(key, 3)
    x = jax.random.normal(kx, (B, Cin, H, W), dtype=jnp.float32)
    # Deterministic synthetic parameters (shapes match nn.Conv2d(Cin, Cpre, 1)).
    weight = jax.random.normal(kw, (Cpre, Cin), dtype=jnp.float32) * 0.1
    bias = jax.random.normal(kb, (Cpre,), dtype=jnp.float32) * 0.1

    fwd = jax.jit(functools.partial(pix_shuffle_upsampler,
                                    output_dim=output_dim, upsample_factor=r))
    out = jax.block_until_ready(fwd(x, weight, bias))

    # Pure-JAX reference of the same semantics.
    ref = jnp.einsum("bchw,oc->bohw", x, weight) + bias[None, :, None, None]
    ref = jnp.maximum(ref, 0.0)
    ref = ref.reshape(B, output_dim, r, r, H, W)
    ref = jnp.transpose(ref, (0, 1, 4, 2, 5, 3)).reshape(B, output_dim, H * r, W * r)

    assert out.shape == (B, output_dim, H * r, W * r)
    assert jnp.allclose(out, ref, atol=1e-5, rtol=1e-5)

    print("KERNEL_OK")
</pallas_src>

<mosaic_0001>
module attributes {stable_mosaic.version = 11 : i64} {
  func.func @_conv1x1_relu_kernel(%arg0: i32, %arg1: i32, %arg2: memref<1x4x256xf32, #tpu.memory_space<vmem>>, %arg3: memref<16x4xf32, #tpu.memory_space<vmem>>, %arg4: memref<16x1xf32, #tpu.memory_space<vmem>>, %arg5: memref<1x16x256xf32, #tpu.memory_space<vmem>>) attributes {dimension_semantics = [#tpu.dimension_semantics<parallel>, #tpu.dimension_semantics<parallel>], iteration_bounds = array<i64: 2, 1>, scalar_prefetch = 0 : i64, scratch_operands = 0 : i64, tpu.core_type = #tpu.core_type<tc>, window_params = [{transform_indices = @transform_0, window_bounds = array<i64: 1, 4, 256>}, {pipeline_mode = #tpu.pipeline_mode<synchronous>, transform_indices = @transform_1, window_bounds = array<i64: 16, 4>}, {pipeline_mode = #tpu.pipeline_mode<synchronous>, transform_indices = @transform_2, window_bounds = array<i64: 16, 1>}, {transform_indices = @transform_3, window_bounds = array<i64: 1, 16, 256>}]} {
    %c0 = arith.constant 0 : index
    %c0_0 = arith.constant 0 : index
    %c0_1 = arith.constant 0 : index
    %0 = vector.load %arg2[%c0, %c0_0, %c0_1] : memref<1x4x256xf32, #tpu.memory_space<vmem>>, vector<1x4x256xf32>
    %1 = vector.shape_cast %0 : vector<1x4x256xf32> to vector<4x256xf32>
    %c0_2 = arith.constant 0 : index
    %c0_3 = arith.constant 0 : index
    %2 = vector.load %arg3[%c0_2, %c0_3] : memref<16x4xf32, #tpu.memory_space<vmem>>, vector<16x4xf32>
    %c0_4 = arith.constant 0 : index
    %c0_5 = arith.constant 0 : index
    %3 = vector.load %arg4[%c0_4, %c0_5] : memref<16x1xf32, #tpu.memory_space<vmem>>, vector<16x1xf32>
    %cst = arith.constant 0.000000e+00 : f32
    %4 = vector.broadcast %cst : f32 to vector<16x256xf32>
    %5 = vector.extract_strided_slice %2 {offsets = [0, 0], sizes = [16, 1], strides = [1, 1]} : vector<16x4xf32> to vector<16x1xf32>
    %6 = vector.extract_strided_slice %1 {offsets = [0, 0], sizes = [1, 256], strides = [1, 1]} : vector<4x256xf32> to vector<1x256xf32>
    %7 = vector.broadcast %5 : vector<16x1xf32> to vector<16x256xf32>
    %8 = vector.broadcast %6 : vector<1x256xf32> to vector<16x256xf32>
    %9 = arith.mulf %7, %8 : vector<16x256xf32>
    %10 = arith.addf %4, %9 : vector<16x256xf32>
    %11 = vector.extract_strided_slice %2 {offsets = [0, 1], sizes = [16, 1], strides = [1, 1]} : vector<16x4xf32> to vector<16x1xf32>
    %12 = vector.extract_strided_slice %1 {offsets = [1, 0], sizes = [1, 256], strides = [1, 1]} : vector<4x256xf32> to vector<1x256xf32>
    %13 = vector.broadcast %11 : vector<16x1xf32> to vector<16x256xf32>
    %14 = vector.broadcast %12 : vector<1x256xf32> to vector<16x256xf32>
    %15 = arith.mulf %13, %14 : vector<16x256xf32>
    %16 = arith.addf %10, %15 : vector<16x256xf32>
    %17 = vector.extract_strided_slice %2 {offsets = [0, 2], sizes = [16, 1], strides = [1, 1]} : vector<16x4xf32> to vector<16x1xf32>
    %18 = vector.extract_strided_slice %1 {offsets = [2, 0], sizes = [1, 256], strides = [1, 1]} : vector<4x256xf32> to vector<1x256xf32>
    %19 = vector.broadcast %17 : vector<16x1xf32> to vector<16x256xf32>
    %20 = vector.broadcast %18 : vector<1x256xf32> to vector<16x256xf32>
    %21 = arith.mulf %19, %20 : vector<16x256xf32>
    %22 = arith.addf %16, %21 : vector<16x256xf32>
    %23 = vector.extract_strided_slice %2 {offsets = [0, 3], sizes = [16, 1], strides = [1, 1]} : vector<16x4xf32> to vector<16x1xf32>
    %24 = vector.extract_strided_slice %1 {offsets = [3, 0], sizes = [1, 256], strides = [1, 1]} : vector<4x256xf32> to vector<1x256xf32>
    %25 = vector.broadcast %23 : vector<16x1xf32> to vector<16x256xf32>
    %26 = vector.broadcast %24 : vector<1x256xf32> to vector<16x256xf32>
    %27 = arith.mulf %25, %26 : vector<16x256xf32>
    %28 = arith.addf %22, %27 : vector<16x256xf32>
    %29 = vector.broadcast %3 : vector<16x1xf32> to vector<16x256xf32>
    %30 = arith.addf %28, %29 : vector<16x256xf32>
    %cst_6 = arith.constant 0.000000e+00 : f32
    %31 = vector.broadcast %cst_6 : f32 to vector<16x256xf32>
    %32 = arith.maximumf %30, %31 : vector<16x256xf32>
    %c0_7 = arith.constant 0 : index
    %c0_8 = arith.constant 0 : index
    %c0_9 = arith.constant 0 : index
    %33 = vector.load %arg5[%c0_7, %c0_8, %c0_9] : memref<1x16x256xf32, #tpu.memory_space<vmem>>, vector<1x16x256xf32>
    %34 = vector.shape_cast %33 : vector<1x16x256xf32> to vector<16x256xf32>
    %35 = vector.shape_cast %32 : vector<16x256xf32> to vector<1x16x256xf32>
    tpu.vector_store %arg5[%c0_7, %c0_8, %c0_9], %35 {strides = array<i32>} : memref<1x16x256xf32, #tpu.memory_space<vmem>>, vector<1x16x256xf32>,
    return
  }
  func.func @transform_0(%arg0: i32, %arg1: i32) -> (i32, i32, i32) {
    %c0_i32 = arith.constant 0 : i32
    %c0_i32_0 = arith.constant 0 : i32
    return %arg0, %c0_i32, %arg1 : i32, i32, i32
  }
  func.func @transform_1(%arg0: i32, %arg1: i32) -> (i32, i32) {
    %c0_i32 = arith.constant 0 : i32
    %c0_i32_0 = arith.constant 0 : i32
    %c0_i32_1 = arith.constant 0 : i32
    return %c0_i32, %c0_i32_0 : i32, i32
  }
  func.func @transform_2(%arg0: i32, %arg1: i32) -> (i32, i32) {
    %c0_i32 = arith.constant 0 : i32
    %c0_i32_0 = arith.constant 0 : i32
    %c0_i32_1 = arith.constant 0 : i32
    return %c0_i32, %c0_i32_0 : i32, i32
  }
  func.func @transform_3(%arg0: i32, %arg1: i32) -> (i32, i32, i32) {
    %c0_i32 = arith.constant 0 : i32
    %c0_i32_0 = arith.constant 0 : i32
    return %arg0, %c0_i32, %arg1 : i32, i32, i32
  }
}

</mosaic_0001>

<llo_original>
// kernel: pix_shuffle_upsampler.1
$region0: #{pix_shuffle_upsampler.1}
  #allocation0 [shape = 'u32[]', space=smem, size = 0x4, offset = 0x4, fixed_abs, tag = 'smem constant byte address 0x4 - core index']
  #allocation1 [shape = 'u32[144,128]{1,0:T(1,128)}', space=vmem, size = 0x12000, scoped, tag = 'internal scratch']
  %s0 = inlined_call_operand.vmem [shape: f32[2,4,256], index: 0, kind: input, shape index: {}]
  %s1 = inlined_call_operand.vmem [shape: f32[16,4], index: 1, kind: input, shape index: {}]
  %s2 = inlined_call_operand.vmem [shape: f32[16,1], index: 2, kind: input, shape index: {}]
  %s3 = inlined_call_operand.vmem [shape: f32[2,16,256], index: 3, kind: output, shape index: {}]
  %s4 = sld [smem:[#allocation0]]
  $region45: #{pix_shuffle_upsampler.1} parent=0
    _
  %s6 = ssub.s32 1, %s4
  %s7 = scalar_select 0, %s6, %s4
  loop: start=0, step=1, limit=4
  $region2: #{pix_shuffle_upsampler.1} parent=0 // loop_pre_header
    _
  $region3: #{pix_shuffle_upsampler.1} parent=0 // loop_header
    %s9 = sphi 0, %s13
    %p10 = scmp.ge.s32.totalorder %s9, 4
    %s16 = sphi 0, %s28
    %s17 = sphi 0, %s24
    %s18 = sphi 0, %s16
    %s19 = sphi 0, %s17
    %s20 = sphi 0, %s18
    %s21 = sphi 0, %s19
    %s33 = sphi 0, %s35
    %s36 = sphi 0, %s33
    %s37 = sphi 0, %s36
    %s53 = sphi 0, %s37
    %s57 = sphi 0, %s57
    %s59 = sphi 0, %s57
    %s60 = sphi 0, %s59
    %s74 = sphi 0, %s60
    %s78 = sphi 0, %s78
    %s80 = sphi 0, %s78
    %s81 = sphi 0, %s80
    %s95 = sphi 0, %s81
    %s103 = sphi 0, %s105
    %s106 = sphi 0, %s103
    %s107 = sphi 0, %s106
    %s123 = sphi 0, %s107
  $region4: #{pix_shuffle_upsampler.1} parent=0 // loop_header_branch
    %12 = sbr.rel (%p10) target = $region8
  $region5: #{pix_shuffle_upsampler.1} parent=0 // loop_body
    %s14 = ssub.s32 %s9, 1
    %s15 = ssub.s32 %s9, 2
    %s22 = sadd.s32 1, %s17
    %p23 = scmp.ge.s32.totalorder %s22, 1
    %s24 = scalar_select %p23, 0, %s22
    %s25 = sadd.s32 1, %s16
    %s26 = scalar_select %p23, %s25, %s16
    %p27 = scmp.ge.s32.totalorder %s26, 2
    %s28 = scalar_select %p27, 0, %s26
    %s29 = ssub.s32 %s16, %s28
    %s30 = ssub.s32 %s17, %s24
    %s31 = sor.u32 %s29, %s30
    %p32 = scmp.eq.s32.totalorder %s31, 0
    %s34 = sadd.s32 %s33, 1
    %s35 = scalar_select %p32, %s33, %s34
    %p38 = pneg %p32
    %p39 = scmp.eq.s32.totalorder %s9, 1
    %p40 = por %p38, %p39
    %p41 = scmp.ne.s32.totalorder %s33, %s36
    %p42 = scmp.eq.s32.totalorder %s9, 0
    %p43 = por %p41, %p42
    %p44 = scmp.ne.s32.totalorder %s33, %s36
    %p45 = scmp.eq.s32.totalorder %s14, 1
    %p46 = por %p44, %p45
    %p47 = scmp.ne.s32.totalorder %s36, %s37
    %p48 = scmp.eq.s32.totalorder %s14, 0
    %p49 = por %p47, %p48
    %p50 = scmp.ne.s32.totalorder %s36, %s37
    %p51 = scmp.eq.s32.totalorder %s15, 1
    %p52 = por %p50, %p51
    %p54 = scmp.ne.s32.totalorder %s37, %s53
    %p55 = scmp.eq.s32.totalorder %s15, 0
    %p56 = por %p54, %p55
    %s58 = sadd.s32 %s57, 1
    %p61 = scmp.eq.s32.totalorder %s9, 1
    %p62 = scmp.ne.s32.totalorder %s57, %s59
    %p63 = scmp.eq.s32.totalorder %s9, 0
    %p64 = por %p62, %p63
    %p65 = scmp.ne.s32.totalorder %s57, %s59
    %p66 = scmp.eq.s32.totalorder %s14, 1
    %p67 = por %p65, %p66
    %p68 = scmp.ne.s32.totalorder %s59, %s60
    %p69 = scmp.eq.s32.totalorder %s14, 0
    %p70 = por %p68, %p69
    %p71 = scmp.ne.s32.totalorder %s59, %s60
    %p72 = scmp.eq.s32.totalorder %s15, 1
    %p73 = por %p71, %p72
    %p75 = scmp.ne.s32.totalorder %s60, %s74
    %p76 = scmp.eq.s32.totalorder %s15, 0
    %p77 = por %p75, %p76
    %s79 = sadd.s32 %s78, 1
    %p82 = scmp.eq.s32.totalorder %s9, 1
    %p83 = scmp.ne.s32.totalorder %s78, %s80
    %p84 = scmp.eq.s32.totalorder %s9, 0
    %p85 = por %p83, %p84
    %p86 = scmp.ne.s32.totalorder %s78, %s80
    %p87 = scmp.eq.s32.totalorder %s14, 1
    %p88 = por %p86, %p87
    %p89 = scmp.ne.s32.totalorder %s80, %s81
    %p90 = scmp.eq.s32.totalorder %s14, 0
    %p91 = por %p89, %p90
    %p92 = scmp.ne.s32.totalorder %s80, %s81
    %p93 = scmp.eq.s32.totalorder %s15, 1
    %p94 = por %p92, %p93
    %p96 = scmp.ne.s32.totalorder %s81, %s95
    %p97 = scmp.eq.s32.totalorder %s15, 0
    %p98 = por %p96, %p97
    %s99 = ssub.s32 %s16, %s28
    %s100 = ssub.s32 %s17, %s24
    %s101 = sor.u32 %s99, %s100
    %p102 = scmp.eq.s32.totalorder %s101, 0
    %s104 = sadd.s32 %s103, 1
    %s105 = scalar_select %p102, %s103, %s104
    %p108 = pneg %p102
    %p109 = scmp.eq.s32.totalorder %s9, 1
    %p110 = por %p108, %p109
    %p111 = scmp.ne.s32.totalorder %s103, %s106
    %p112 = scmp.eq.s32.totalorder %s9, 0
    %p113 = por %p111, %p112
    %p114 = scmp.ne.s32.totalorder %s103, %s106
    %p115 = scmp.eq.s32.totalorder %s14, 1
    %p116 = por %p114, %p115
    %p117 = scmp.ne.s32.totalorder %s106, %s107
    %p118 = scmp.eq.s32.totalorder %s14, 0
    %p119 = por %p117, %p118
    %p120 = scmp.ne.s32.totalorder %s106, %s107
    %p121 = scmp.eq.s32.totalorder %s15, 1
    %p122 = por %p120, %p121
    %p124 = scmp.ne.s32.totalorder %s107, %s123
    %p125 = scmp.eq.s32.totalorder %s15, 0
    %p126 = por %p124, %p125
    %p127 = scmp.le.s32.totalorder 1, %s9
    %p128 = scmp.lt.s32.totalorder %s9, 3
    %p129 = pnand %p127, %p128
    %p130 = pneg %p129
    // Predicated region
    $region9: #{pix_shuffle_upsampler.1} parent=5 // pred_check
      _
    $region10: #{pix_shuffle_upsampler.1} parent=5 // pred_check_branch
      %132 = sbr.rel (%p129) target = $region12
    $region11: #{pix_shuffle_upsampler.1} parent=5 // pred_region
      %s133 = ssub.s32 %s9, 1
      // Predicated region
      $region13: #{pix_shuffle_upsampler.1} parent=11 // pred_check
        %p134 = pneg %p70
      $region14: #{pix_shuffle_upsampler.1} parent=11 // pred_check_branch
        %136 = sbr.rel (%p134) target = $region16
      $region15: #{pix_shuffle_upsampler.1} parent=11 // pred_region
        _
      $region16: #{pix_shuffle_upsampler.1} parent=11 // pred_fallthru
        _
      // Predicated region
      $region17: #{pix_shuffle_upsampler.1} parent=11 // pred_check
        %p137 = pneg %p91
      $region18: #{pix_shuffle_upsampler.1} parent=11 // pred_check_branch
        %139 = sbr.rel (%p137) target = $region20
      $region19: #{pix_shuffle_upsampler.1} parent=11 // pred_region
        _
      $region20: #{pix_shuffle_upsampler.1} parent=11 // pred_fallthru
        _
    $region12: #{pix_shuffle_upsampler.1} parent=5 // pred_fallthru
      _
    %p140 = scmp.lt.s32.totalorder %s9, 2
    // Predicated region
    $region21: #{pix_shuffle_upsampler.1} parent=5 // pred_check
      %p141 = pneg %p140
    $region22: #{pix_shuffle_upsampler.1} parent=5 // pred_check_branch
      %143 = sbr.rel (%p141) target = $region24
    $region23: #{pix_shuffle_upsampler.1} parent=5 // pred_region
      // Predicated region
      $region25: #{pix_shuffle_upsampler.1} parent=23 // pred_check
        %p144 = pneg %p43
      $region26: #{pix_shuffle_upsampler.1} parent=23 // pred_check_branch
        %146 = sbr.rel (%p144) target = $region28
      $region27: #{pix_shuffle_upsampler.1} parent=23 // pred_region
        %s147 = smul.u32 2, %s17
        %p148 = scmp.lt.s32.totalorder %s16, 1
        %s149 = scalar_select %p148, %s16, 1
        %p150 = scmp.lt.s32.totalorder %s147, 1
        %s151 = scalar_select %p150, %s147, 1
        %s152 = smul.addr %s149, 2
        %s153 = sadd.s32 %s151, %s152
        %s154 = smul.addr %s153, 4
        %s155 = scalar_lea.vmem %s0, %s154
        %s156 = smul.u32 2, %s17
      $region28: #{pix_shuffle_upsampler.1} parent=23 // pred_fallthru
        _
    $region24: #{pix_shuffle_upsampler.1} parent=5 // pred_fallthru
      _
    %p157 = scmp.le.s32.totalorder 1, %s9
    %p158 = scmp.lt.s32.totalorder %s9, 3
    %p159 = pnand %p157, %p158
    %p160 = pneg %p159
    // Predicated region
    $region29: #{pix_shuffle_upsampler.1} parent=5 // pred_check
      _
    $region30: #{pix_shuffle_upsampler.1} parent=5 // pred_check_branch
      %162 = sbr.rel (%p159) target = $region32
    $region31: #{pix_shuffle_upsampler.1} parent=5 // pred_region
      %s163 = ssub.s32 %s9, 1
      %s164 = smul.u32 2, %s19
      %p165 = scmp.lt.s32.totalorder %s18, 1
      %s166 = scalar_select %p165, %s18, 1
      %p167 = scmp.lt.s32.totalorder %s164, 1
      %s168 = scalar_select %p167, %s164, 1
      %s169 = smul.addr %s166, 2
      %s170 = sadd.s32 %s168, %s169
      %s171 = smul.addr %s170, 4
      %s172 = scalar_lea.vmem %s0, %s171
      %p173 = pneg %p49
      %p174 = pneg %p46
      %p175 = pneg %p70
      %p176 = pneg %p67
      %p177 = pneg %p91
      %p178 = pneg %p88
      %p179 = pneg %p119
      %p180 = pneg %p116
      %s181 = smul.u32 2, %s19
      %p182 = scmp.lt.s32.totalorder %s18, 1
      %s183 = scalar_select %p182, %s18, 1
      %p184 = scmp.lt.s32.totalorder %s181, 1
      %s185 = scalar_select %p184, %s181, 1
      %s186 = smul.addr %s183, 4
      %s187 = sadd.s32 %s185, %s186
      %s188 = smul.addr %s187, 8
      %s189 = scalar_lea.vmem %s3, %s188
      %s190 = smul.u32 2, %s19
      %p191 = scmp.lt.s32.totalorder %s18, 1
      %s192 = scalar_select %p191, %s18, 1
      %p193 = scmp.lt.s32.totalorder %s190, 1
      %s194 = scalar_select %p193, %s190, 1
      %s195 = smul.addr %s192, 2
      %s196 = sadd.s32 %s194, %s195
      %s197 = smul.addr %s196, 4
      %s198 = scalar_lea.vmem %s0, %s197
      %s199 = smul.u32 2, %s19
      %s200 = smul.u32 2, %s19
      %p201 = scmp.lt.s32.totalorder %s18, 1
      %s202 = scalar_select %p201, %s18, 1
      %p203 = scmp.lt.s32.totalorder %s200, 1
      %s204 = scalar_select %p203, %s200, 1
      %s205 = smul.addr %s202, 4
      %s206 = sadd.s32 %s204, %s205
      %s207 = smul.addr %s206, 8
      %s208 = scalar_lea.vmem %s3, %s207
      %s209 = smul.u32 2, %s19
      %v210 = vld [vmem:[%s198] sm:$0xff]
      %v211 = vld [vmem:[%s1] sm:$0xff]
      %v212 = vld [vmem:[%s1 + $0x8] sm:$0xff]
      %v213 = vld [vmem:[%s2] sm:$0xff]
      %v214 = vld [vmem:[%s2 + $0x8] sm:$0xff]
      %216 = vset.pattern.permute.xlu0 0
      %217 = vperm.xlu0 %216, %v211
      %v218 = vpop.permute.xlu0 %217
      %221 = vset.pattern.permute.xlu0 0
      %222 = vperm.xlu0 %221, %v212
      %v223 = vpop.permute.xlu0 %222
      %v226 = vlaneseq
      %v227 = vshrl.u32 %v226, 7
      %v228 = vsub.s32 0, %v227
      %v229 = vrot.slane %v210, %v228
      %v230 = vlaneseq
      %v231 = vshrl.u32 %v230, 7
      %v232 = vsub.s32 4, %v231
      %v233 = vrot.slane %v210, %v232
      %v236 = vlaneseq
      %v237 = vshrl.u32 %v236, 7
      %v238 = vsub.s32 0, %v237
      %v239 = vrot.slane %v229, %v238
      %v240 = vlaneseq
      %v241 = vshrl.u32 %v240, 7
      %v242 = vsub.s32 0, %v241
      %v243 = vrot.slane %v233, %v242
      %v244 = vmul.f32 %v218, %v239
      %v245 = vmul.f32 %v218, %v243
      %v246 = vmul.f32 %v223, %v239
      %v247 = vmul.f32 %v223, %v243
      %v248 = vadd.f32 %v244, 0.0
      %v249 = vadd.f32 %v245, 0.0
      %v250 = vadd.f32 %v246, 0.0
      %v251 = vadd.f32 %v247, 0.0
      %252 = vset.pattern.permute.xlu0 1
      %253 = vperm.xlu0 %252, %v211
      %v254 = vpop.permute.xlu0 %253
      %256 = vset.pattern.permute.xlu0 1
      %257 = vperm.xlu0 %256, %v212
      %v258 = vpop.permute.xlu0 %257
      %v260 = vlaneseq
      %v261 = vshrl.u32 %v260, 7
      %v262 = vsub.s32 1, %v261
      %v263 = vrot.slane %v210, %v262
      %v264 = vlaneseq
      %v265 = vshrl.u32 %v264, 7
      %v266 = vsub.s32 5, %v265
      %v267 = vrot.slane %v210, %v266
      %v270 = vlaneseq
      %v271 = vshrl.u32 %v270, 7
      %v272 = vsub.s32 1, %v271
      %v273 = vrot.slane %v263, %v272
      %v274 = vlaneseq
      %v275 = vshrl.u32 %v274, 7
      %v276 = vsub.s32 1, %v275
      %v277 = vrot.slane %v267, %v276
      %v278 = vmul.f32 %v254, %v273
      %v279 = vmul.f32 %v254, %v277
      %v280 = vmul.f32 %v258, %v273
      %v281 = vmul.f32 %v258, %v277
      %v282 = vadd.f32 %v248, %v278
      %v283 = vadd.f32 %v249, %v279
      %v284 = vadd.f32 %v250, %v280
      %v285 = vadd.f32 %v251, %v281
      %286 = vset.pattern.permute.xlu0 2
      %287 = vperm.xlu0 %286, %v211
      %v288 = vpop.permute.xlu0 %287
      %290 = vset.pattern.permute.xlu0 2
      %291 = vperm.xlu0 %290, %v212
      %v292 = vpop.permute.xlu0 %291
      %v294 = vlaneseq
      %v295 = vshrl.u32 %v294, 7
      %v296 = vsub.s32 2, %v295
      %v297 = vrot.slane %v210, %v296
      %v298 = vlaneseq
      %v299 = vshrl.u32 %v298, 7
      %v300 = vsub.s32 6, %v299
      %v301 = vrot.slane %v210, %v300
      %v304 = vlaneseq
      %v305 = vshrl.u32 %v304, 7
      %v306 = vsub.s32 2, %v305
      %v307 = vrot.slane %v297, %v306
      %v308 = vlaneseq
      %v309 = vshrl.u32 %v308, 7
      %v310 = vsub.s32 2, %v309
      %v311 = vrot.slane %v301, %v310
      %v312 = vmul.f32 %v288, %v307
      %v313 = vmul.f32 %v288, %v311
      %v314 = vmul.f32 %v292, %v307
      %v315 = vmul.f32 %v292, %v311
      %v316 = vadd.f32 %v282, %v312
      %v317 = vadd.f32 %v283, %v313
      %v318 = vadd.f32 %v284, %v314
      %v319 = vadd.f32 %v285, %v315
      %320 = vset.pattern.permute.xlu0 3
      %321 = vperm.xlu0 %320, %v211
      %v322 = vpop.permute.xlu0 %321
      %324 = vset.pattern.permute.xlu0 3
      %325 = vperm.xlu0 %324, %v212
      %v326 = vpop.permute.xlu0 %325
      %v328 = vlaneseq
      %v329 = vshrl.u32 %v328, 7
      %v330 = vsub.s32 3, %v329
      %v331 = vrot.slane %v210, %v330
      %v332 = vlaneseq
      %v333 = vshrl.u32 %v332, 7
      %v334 = vsub.s32 7, %v333
      %v335 = vrot.slane %v210, %v334
      %v338 = vlaneseq
      %v339 = vshrl.u32 %v338, 7
      %v340 = vsub.s32 3, %v339
      %v341 = vrot.slane %v331, %v340
      %v342 = vlaneseq
      %v343 = vshrl.u32 %v342, 7
      %v344 = vsub.s32 3, %v343
      %v345 = vrot.slane %v335, %v344
      %v346 = vmul.f32 %v322, %v341
      %v347 = vmul.f32 %v322, %v345
      %v348 = vmul.f32 %v326, %v341
      %v349 = vmul.f32 %v326, %v345
      %v350 = vadd.f32 %v316, %v346
      %v351 = vadd.f32 %v317, %v347
      %v352 = vadd.f32 %v318, %v348
      %v353 = vadd.f32 %v319, %v349
      %355 = vset.pattern.permute.xlu0 0
      %356 = vperm.xlu0 %355, %v213
      %v357 = vpop.permute.xlu0 %356
      %360 = vset.pattern.permute.xlu0 0
      %361 = vperm.xlu0 %360, %v214
      %v362 = vpop.permute.xlu0 %361
      %v364 = vadd.f32 %v350, %v357
      %v365 = vadd.f32 %v351, %v357
      %v366 = vadd.f32 %v352, %v362
      %v367 = vadd.f32 %v353, %v362
      %v368 = vmax.f32 %v364, 0.0
      %v369 = vmax.f32 %v365, 0.0
      %v370 = vmax.f32 %v366, 0.0
      %v371 = vmax.f32 %v367, 0.0
      %372 = vst [vmem:[%s208] sm:$0xff] %v368
      %373 = vst [vmem:[%s208 + $0x8] sm:$0xff] %v369
      %374 = vst [vmem:[%s208 + $0x10] sm:$0xff] %v370
      %375 = vst [vmem:[%s208 + $0x18] sm:$0xff] %v371
      %s376 = smul.u32 2, %s19
      %p377 = scmp.lt.s32.totalorder %s18, 1
      %s378 = scalar_select %p377, %s18, 1
      %p379 = scmp.lt.s32.totalorder %s376, 1
      %s380 = scalar_select %p379, %s376, 1
      %s381 = smul.addr %s378, 4
      %s382 = sadd.s32 %s380, %s381
      %s383 = smul.addr %s382, 8
      %s384 = scalar_lea.vmem %s3, %s383
      // Predicated region
      $region33: #{pix_shuffle_upsampler.1} parent=31 // pred_check
        %p385 = pneg %p116
      $region34: #{pix_shuffle_upsampler.1} parent=31 // pred_check_branch
        %387 = sbr.rel (%p385) target = $region36
      $region35: #{pix_shuffle_upsampler.1} parent=31 // pred_region
        %s388 = smul.u32 2, %s19
      $region36: #{pix_shuffle_upsampler.1} parent=31 // pred_fallthru
        _
    $region32: #{pix_shuffle_upsampler.1} parent=5 // pred_fallthru
      _
    %p389 = scmp.le.s32.totalorder 2, %s9
    // Predicated region
    $region37: #{pix_shuffle_upsampler.1} parent=5 // pred_check
      %p390 = pneg %p389
    $region38: #{pix_shuffle_upsampler.1} parent=5 // pred_check_branch
      %392 = sbr.rel (%p390) target = $region40
    $region39: #{pix_shuffle_upsampler.1} parent=5 // pred_region
      %s393 = ssub.s32 %s9, 2
      // Predicated region
      $region41: #{pix_shuffle_upsampler.1} parent=39 // pred_check
        %p394 = pneg %p122
      $region42: #{pix_shuffle_upsampler.1} parent=39 // pred_check_branch
        %396 = sbr.rel (%p394) target = $region44
      $region43: #{pix_shuffle_upsampler.1} parent=39 // pred_region
        %s397 = smul.u32 2, %s21
        %p398 = scmp.lt.s32.totalorder %s20, 1
        %s399 = scalar_select %p398, %s20, 1
        %p400 = scmp.lt.s32.totalorder %s397, 1
        %s401 = scalar_select %p400, %s397, 1
        %s402 = smul.addr %s399, 4
        %s403 = sadd.s32 %s401, %s402
        %s404 = smul.addr %s403, 8
        %s405 = scalar_lea.vmem %s3, %s404
      $region44: #{pix_shuffle_upsampler.1} parent=39 // pred_fallthru
        _
    $region40: #{pix_shuffle_upsampler.1} parent=5 // pred_fallthru
      _
  $region6: #{pix_shuffle_upsampler.1} parent=0 // loop_footer
    %s13 = sadd.s32 1, %s9
  $region7: #{pix_shuffle_upsampler.1} parent=0 // loop_footer_branch
    %8 = sbr.rel target = $region3
  $region8: #{pix_shuffle_upsampler.1} parent=0 // loop_exit
    _

</llo_original>
